<compile_context>
chip_gen: v7x
topology: tpu7x:2x2x1
jax: 0.10.0
libtpu: 0.0.40
codegen_flags: <defaults>
</compile_context>

<pallas_src>
import math

import jax
import jax.numpy as jnp
from jax.experimental import pallas as pl
from jax.experimental.pallas import tpu as pltpu


def _plan_row_chunks(n: int, max_dmas: int, min_rows_per_dma: int, row_align: int):
    """Split [0, n) rows into <= max_dmas contiguous chunks with aligned starts."""
    step = max(row_align, min_rows_per_dma, 1)
    if max_dmas <= 1 or n < 2 * step:
        return ((0, n),)
    n_chunks = min(max_dmas, n // step)
    cs = -(-n // n_chunks)                    # ceil(n / n_chunks)
    cs = -(-cs // row_align) * row_align      # round chunk size up to aligned rows
    chunks, start = [], 0
    while start < n:
        rn = min(cs, n - start)
        chunks.append((start, rn))
        start += rn
    return tuple(chunks)


def _make_flatten_dma_kernel(n_rows: int, chunks):
    """Kernel: one HBM->HBM DMA per row-chunk, all in flight concurrently."""

    def kernel(x_hbm, o_hbm, sem):
        copies = []
        for i, (r0, rn) in enumerate(chunks):
            if r0 == 0 and rn == n_rows:
                # Whole-array copy: no slicing needed.
                cp = pltpu.make_async_copy(x_hbm, o_hbm, sem.at[i])
            else:
                cp = pltpu.make_async_copy(
                    x_hbm.at[pl.ds(r0, rn)],
                    o_hbm.at[pl.ds(r0, rn)],
                    sem.at[i],
                )
            cp.start()
            copies.append(cp)
        # Wait for every chunk before the kernel (and its output) completes.
        for cp in copies:
            cp.wait()

    return kernel


def flatten(
    x: jax.Array,
    *,
    max_dmas: int = 4,
    min_rows_per_dma: int = 1024,
) -> jax.Array:
    """Pallas equivalent of Flatten.forward: (N, ...) -> (N, prod(...))."""
    n = x.shape[0]
    d = int(math.prod(x.shape[1:])) if x.ndim > 1 else 1

    # Metadata-only, row-major-preserving reshape — this is the actual flatten.
    # The cheapest correct production implementation is `return x2`.
    x2 = jnp.reshape(x, (n, d))

    itemsize = jnp.dtype(x.dtype).itemsize
    row_align = max(8, 32 // itemsize)  # packed-sublane multiple per dtype
    chunks = _plan_row_chunks(n, max_dmas, min_rows_per_dma, row_align)

    return pl.pallas_call(
        _make_flatten_dma_kernel(n, chunks),
        out_shape=jax.ShapeDtypeStruct((n, d), x.dtype),
        # Operands stay in HBM: no auto-pipelining, no VMEM staging.
        in_specs=[pl.BlockSpec(memory_space=pl.ANY)],
        out_specs=pl.BlockSpec(memory_space=pl.ANY),
        scratch_shapes=[pltpu.SemaphoreType.DMA((len(chunks),))],
    )(x2)


if __name__ == "__main__":
    key = jax.random.PRNGKey(0)

    # Small NCHW feature map, consistent with "flatten before a linear layer".
    x = jax.random.normal(key, (2, 4, 16, 16), dtype=jnp.float32)
    y = flatten(x)
    jax.block_until_ready(y)
    y_ref = x.reshape(x.shape[0], -1)
    assert y.shape == y_ref.shape, (y.shape, y_ref.shape)
    assert y.dtype == y_ref.dtype, (y.dtype, y_ref.dtype)
    assert jnp.array_equal(y, y_ref), "flatten kernel mismatch (single DMA)"

    # Multi-DMA path + packed dtype (bf16) + odd row width (D = 105, not a
    # multiple of 128).  Chunk starts stay aligned to the bf16 sublane pack.
    x2 = jax.random.normal(key, (32, 3, 7, 5), dtype=jnp.bfloat16)
    y2 = flatten(x2, max_dmas=4, min_rows_per_dma=8)
    jax.block_until_ready(y2)
    y2_ref = x2.reshape(x2.shape[0], -1)
    assert y2.shape == y2_ref.shape, (y2.shape, y2_ref.shape)
    assert jnp.array_equal(y2, y2_ref), "flatten kernel mismatch (multi DMA)"

    # Degenerate 1-D input (d = 1), matching torch .view(-1, 1).
    x3 = jax.random.normal(key, (16,), dtype=jnp.float32)
    y3 = flatten(x3)
    jax.block_until_ready(y3)
    assert y3.shape == (16, 1), y3.shape
    assert jnp.array_equal(y3, x3.reshape(16, 1)), "flatten kernel mismatch (1-D)"

    print("KERNEL_OK")
</pallas_src>

<mosaic_0001>
module attributes {stable_mosaic.version = 11 : i64} {
  func.func @kernel(%arg0: memref<2x1024xf32, #tpu.memory_space<any>>, %arg1: memref<2x1024xf32, #tpu.memory_space<any>>, %arg2: memref<1x!tpu.dma_semaphore, #tpu.memory_space<semaphore_mem>>) attributes {dimension_semantics = [], scalar_prefetch = 0 : i64, scratch_operands = 1 : i64, tpu.core_type = #tpu.core_type<tc>} {
    %c0_i32 = arith.constant 0 : i32
    %0 = tpu.memref_slice %arg2[%c0_i32] : memref<1x!tpu.dma_semaphore, #tpu.memory_space<semaphore_mem>> -> memref<1x!tpu.dma_semaphore, #tpu.memory_space<semaphore_mem>>
    %1 = tpu.memref_squeeze %0 : memref<1x!tpu.dma_semaphore, #tpu.memory_space<semaphore_mem>> -> memref<!tpu.dma_semaphore, #tpu.memory_space<semaphore_mem>>
    tpu.enqueue_dma source(%arg0 : memref<2x1024xf32, #tpu.memory_space<any>>) target(%arg1 : memref<2x1024xf32, #tpu.memory_space<any>>) target_semaphore(%1 : memref<!tpu.dma_semaphore, #tpu.memory_space<semaphore_mem>>)
    %c0_i32_0 = arith.constant 0 : i32
    %2 = tpu.memref_slice %arg2[%c0_i32_0] : memref<1x!tpu.dma_semaphore, #tpu.memory_space<semaphore_mem>> -> memref<1x!tpu.dma_semaphore, #tpu.memory_space<semaphore_mem>>
    %3 = tpu.memref_squeeze %2 : memref<1x!tpu.dma_semaphore, #tpu.memory_space<semaphore_mem>> -> memref<!tpu.dma_semaphore, #tpu.memory_space<semaphore_mem>>
    tpu.wait_dma2 semaphore(%3 : memref<!tpu.dma_semaphore, #tpu.memory_space<semaphore_mem>>) src(%arg0 : memref<2x1024xf32, #tpu.memory_space<any>>) dst(%arg1 : memref<2x1024xf32, #tpu.memory_space<any>>)
    return
  }
}

</mosaic_0001>

<llo_original>
// kernel: tpu_custom_call.1
$region0: #{tpu_custom_call.1}
  #allocation0 [shape = 'u32[]', space=smem, size = 0x4, offset = 0x4, fixed_abs, tag = 'smem constant byte address 0x4 - core index']
  #allocation1 [shape = 'u32[144,128]{1,0:T(1,128)}', space=vmem, size = 0x12000, scoped, tag = 'internal scratch']
  #allocation2 [shape = 's32[1]{0}', space=sflag, size = 0x4, scoped, tag = 'scratch operand']
  #allocation3 [shape = 's32[]', space=sflag, size = 0x4, offset = 0, fixed_abs, tag = 'sflag constant byte address 0x0 - dummy sync flag']
  #allocation4 [shape = 'u32[0]{0}', space=smem, size = 0, offset = 0, fixed_abs, tag = 'smem constant byte address 0x0 - null']
  %s0 = inlined_call_operand.hbm [shape: f32[2,1024], index: 0, kind: input, shape index: {}]
  %s1 = inlined_call_operand.hbm [shape: f32[2,1024], index: 1, kind: output, shape index: {}]
  %s2 = sld [smem:[#allocation0]]
  $region2: #{tpu_custom_call.1} parent=0
    _
  %s4 = ssub.s32 1, %s2
  %s5 = scalar_select 0, %s4, %s2
  %s7 = sshll.u32 1, 14
  %s8 = sxor.u32 4294967295, %s7
  %s11 = sshll.u32 3, 24
  %s12 = sxor.u32 4294967295, %s11
  %s13 = sand.u32 0, %s12
  %s15 = sor.u32 %s13, 0
  %18 = dma.general %s0, 256, %s1, [#allocation2], [#allocation3], [#allocation4], %s15, 0
  %s19 = smul.u32 2, 1
  %s20 = smul.u32 %s19, 8
  %s21 = sshll.u32 %s20, 4
  %22 = dma.done [#allocation2], %s21
  %23 = vsyncmov [#allocation2]
  %s24 = vpop.sfrf %23
  %p25 = scmp.eq.s32.totalorder %s24, 0
  %p26 = pneg %p25
  %28 = shalt.err (%p26)

</llo_original>
